<compile_context>
chip_gen: v7x
topology: tpu7x:2x2x1
jax: 0.10.0
libtpu: 0.0.40
codegen_flags: <defaults>
</compile_context>

<pallas_src>
import functools

import jax
import jax.numpy as jnp
from jax import lax
from jax.experimental import pallas as pl
from jax.experimental.pallas import tpu as pltpu


def _round_up(x, m):
    return (x + m - 1) // m * m


def _uplift_mlp_kernel(x_ref, w1_ref, b1_ref, w2_ref, b2_ref, w3_ref, b3_ref, out_ref,
                       *, compute_dtype):
    """One batch tile: x (tb, D0) -> out (1, tb), feature-major activations."""
    # Cast the streamed tile in-kernel (no wrapper-side HBM pass over x).
    xc = x_ref[...].astype(compute_dtype)

    # Layer 1: h1[d1, t] = sum_k W1[d1, k] * x[t, k]  (minor-minor contraction, MXU, f32 acc).
    h1 = lax.dot_general(
        w1_ref[...], xc,
        dimension_numbers=(((1,), (1,)), ((), ())),
        preferred_element_type=jnp.float32)                      # (D1, tb), lane-dense
    h1 = jnp.maximum(h1 + b1_ref[...], 0.0)

    # Layer 2: standard (D2, D1) @ (D1, tb) on the MXU, f32 accumulation.
    h2 = jnp.dot(w2_ref[...], h1.astype(compute_dtype),
                 preferred_element_type=jnp.float32)             # (D2, tb), lane-dense
    h2 = jnp.maximum(h2 + b2_ref[...], 0.0)

    # Output layer (D2 -> 1) off the MXU: broadcast multiply + cross-sublane sum (VPU/XLU filler).
    o = jnp.sum(h2 * w3_ref[...], axis=0, keepdims=True)         # (1, tb)
    out_ref[...] = jnp.tanh(o + b3_ref[0, 0])


def uplift_ranker_forward(x, params, *, block_rows=8192, compute_dtype=jnp.bfloat16,
                          vmem_limit_bytes=48 * 1024 * 1024):
    """x: [B, D_in]; params: list of (W [out, in], b [out]) for the 3 layers (PyTorch-native).

    Returns [B, 1] float32, matching UpliftRanker.forward.  x may be float32 or bfloat16; it is
    streamed as-is and cast in-kernel (pass bf16 upstream to halve input HBM traffic on v5e/v6e;
    on v7x f32 streaming is fine — the kernel is step/MXU-cadence bound there, not HBM bound).
    """
    (w1, b1), (w2, b2), (w3, b3) = params
    B, D0 = x.shape
    D1 = w1.shape[0]
    D2 = w2.shape[0]

    if B == 0:
        return jnp.zeros((0, 1), jnp.float32)

    # Batch tile: multiple of 128 (lane-dense output blocks), capped at block_rows but never
    # bigger than needed for small B.  block_rows is the knob to sweep per generation
    # (feature-major intermediates are ~1 KB of live VMEM per row at f32 x).
    tb = _round_up(min(block_rows, _round_up(B, 128)), 128)
    n_tiles = pl.cdiv(B, tb)

    # Tiny parameter arrays: wrapper casts/reshapes are negligible HBM traffic.
    w1c = w1.astype(compute_dtype)                       # (D1, D0)
    w2c = w2.astype(compute_dtype)                       # (D2, D1)
    b1c = b1.reshape(D1, 1).astype(jnp.float32)          # column vectors: broadcast over lanes
    b2c = b2.reshape(D2, 1).astype(jnp.float32)
    w3c = w3.reshape(D2, 1).astype(jnp.float32)          # used on the VPU in f32
    b3c = b3.reshape(1, 1).astype(jnp.float32)           # SMEM scalar

    x_bytes = B * D0 * jnp.dtype(x.dtype).itemsize
    w_bytes = (D1 * D0 + D2 * D1) * jnp.dtype(compute_dtype).itemsize
    cost = pl.CostEstimate(
        flops=2 * B * (D0 * D1 + D1 * D2 + D2),
        transcendentals=B,
        bytes_accessed=x_bytes + w_bytes + (D1 + D2 + D2 + 1) * 4 + B * 4)

    kernel = functools.partial(_uplift_mlp_kernel, compute_dtype=compute_dtype)

    out = pl.pallas_call(
        kernel,
        out_shape=jax.ShapeDtypeStruct((1, B), jnp.float32),
        grid=(n_tiles,),
        in_specs=[
            pl.BlockSpec((tb, D0), lambda i: (i, 0)),            # x: streamed per batch tile
            pl.BlockSpec((D1, D0), lambda i: (0, 0)),            # W1: pinned in VMEM
            pl.BlockSpec((D1, 1), lambda i: (0, 0)),             # b1 (column)
            pl.BlockSpec((D2, D1), lambda i: (0, 0)),            # W2
            pl.BlockSpec((D2, 1), lambda i: (0, 0)),             # b2 (column)
            pl.BlockSpec((D2, 1), lambda i: (0, 0)),             # w3 (column, VPU path)
            pl.BlockSpec(memory_space=pltpu.MemorySpace.SMEM),   # b3 scalar
        ],
        out_specs=pl.BlockSpec((1, tb), lambda i: (0, i)),       # lane-dense output slab
        compiler_params=pltpu.CompilerParams(
            dimension_semantics=("parallel",),                   # megacore sharding on v7x
            vmem_limit_bytes=vmem_limit_bytes),
        cost_estimate=cost,
    )(x, w1c, b1c, w2c, b2c, w3c, b3c)

    # (1, B) -> (B, 1); row-major flatten preserves batch ordering.
    return out.reshape(B, 1)


def init_params(key, net_structures):
    """Deterministic init mirroring nn.Linear (uniform +/- 1/sqrt(fan_in)), PyTorch-native layout.

    Layers: fc1..fc{L-1} from net_structures[i] -> net_structures[i+1], plus fc{L}: last -> 1.
    Returns [(W [out, in], b [out]), ...].
    """
    dims = list(net_structures) + [1]
    params = []
    for i in range(len(dims) - 1):
        fan_in, fan_out = dims[i], dims[i + 1]
        key, kw, kb = jax.random.split(key, 3)
        bound = 1.0 / float(fan_in) ** 0.5
        w = jax.random.uniform(kw, (fan_out, fan_in), jnp.float32, -bound, bound)
        b = jax.random.uniform(kb, (fan_out,), jnp.float32, -bound, bound)
        params.append((w, b))
    return params


def reference_forward(x, params):
    """Pure-JAX f32 reference matching the PyTorch forward semantics."""
    h = x
    for w, b in params[:-1]:
        h = jax.nn.relu(jnp.dot(h, w.T, precision=lax.Precision.HIGHEST) + b)
    w, b = params[-1]
    return jnp.tanh(jnp.dot(h, w.T, precision=lax.Precision.HIGHEST) + b)


def reference_forward_mixed(x, params, compute_dtype):
    """Reference mirroring the kernel's mixed precision (cast matmul inputs, f32 accumulate,
    f32 bias/relu, f32 VPU final layer)."""
    (w1, b1), (w2, b2), (w3, b3) = params
    h = jnp.dot(x.astype(compute_dtype), w1.astype(compute_dtype).T,
                preferred_element_type=jnp.float32)
    h = jnp.maximum(h + b1, 0.0)
    h = jnp.dot(h.astype(compute_dtype), w2.astype(compute_dtype).T,
                preferred_element_type=jnp.float32)
    h = jnp.maximum(h + b2, 0.0)
    o = jnp.sum(h * w3.reshape(1, -1), axis=1, keepdims=True) + b3.reshape(1, 1)
    return jnp.tanh(o)


if __name__ == "__main__":
    # Small shapes consistent with the module: net_structures = [32, 64, 16]
    # -> fc1: 32->64, fc2: 64->16, fc3: 16->1.
    net_structures = [32, 64, 16]
    batch = 300  # not a multiple of the batch tile -> exercises the ragged-tail (masked) path

    key = jax.random.PRNGKey(0)
    key, kx = jax.random.split(key)
    x = jax.random.normal(kx, (batch, net_structures[0]), dtype=jnp.float32)
    params = init_params(key, net_structures)

    ref32 = reference_forward(x, params)

    # 1) f32 compute path: exact semantics of the PyTorch module.
    out32 = jax.block_until_ready(
        uplift_ranker_forward(x, params, compute_dtype=jnp.float32))
    assert out32.shape == (batch, 1), out32.shape
    assert jnp.allclose(out32, ref32, atol=1e-4, rtol=1e-4), \
        float(jnp.max(jnp.abs(out32 - ref32)))

    # 2) Default bf16-matmul perf path: compare against the matched mixed-precision reference
    #    (tight) and the full-f32 reference (loose, bf16 rounding of inputs/weights).
    out_bf = jax.block_until_ready(uplift_ranker_forward(x, params))
    ref_bf = reference_forward_mixed(x, params, jnp.bfloat16)
    assert out_bf.shape == (batch, 1), out_bf.shape
    assert jnp.allclose(out_bf, ref_bf, atol=2e-3, rtol=2e-3), \
        float(jnp.max(jnp.abs(out_bf - ref_bf)))
    assert jnp.allclose(out_bf, ref32, atol=3e-2, rtol=3e-2), \
        float(jnp.max(jnp.abs(out_bf - ref32)))

    # 3) Multi-tile grid (3 batch tiles of 128 rows, last one ragged) to exercise the pipelined
    #    path + masked partial block read/write with no wrapper padding.
    out_mt = jax.block_until_ready(
        uplift_ranker_forward(x, params, block_rows=128))
    assert jnp.allclose(out_mt, ref_bf, atol=2e-3, rtol=2e-3), \
        float(jnp.max(jnp.abs(out_mt - ref_bf)))

    # 4) bf16 activations supplied directly by the producer (halves input HBM traffic on v5e/v6e;
    #    the in-kernel cast becomes a no-op).
    out_xb = jax.block_until_ready(
        uplift_ranker_forward(x.astype(jnp.bfloat16), params))
    assert jnp.allclose(out_xb, ref_bf, atol=2e-3, rtol=2e-3), \
        float(jnp.max(jnp.abs(out_xb - ref_bf)))

    print("KERNEL_OK")
</pallas_src>

<mosaic_0001>
module attributes {stable_mosaic.version = 11 : i64} {
  func.func @_uplift_mlp_kernel(%arg0: i32, %arg1: memref<384x32xf32, #tpu.memory_space<vmem>>, %arg2: memref<64x32xf32, #tpu.memory_space<vmem>>, %arg3: memref<64x1xf32, #tpu.memory_space<vmem>>, %arg4: memref<16x64xf32, #tpu.memory_space<vmem>>, %arg5: memref<16x1xf32, #tpu.memory_space<vmem>>, %arg6: memref<16x1xf32, #tpu.memory_space<vmem>>, %arg7: memref<1x1xf32, #tpu.memory_space<smem>>, %arg8: memref<1x384xf32, #tpu.memory_space<vmem>>) attributes {dimension_semantics = [#tpu.dimension_semantics<parallel>], iteration_bounds = array<i64: 1>, scalar_prefetch = 0 : i64, scratch_operands = 0 : i64, tpu.core_type = #tpu.core_type<tc>, window_params = [{transform_indices = @transform_0, window_bounds = array<i64: 384, 32>}, {pipeline_mode = #tpu.pipeline_mode<synchronous>, transform_indices = @transform_1, window_bounds = array<i64: 64, 32>}, {pipeline_mode = #tpu.pipeline_mode<synchronous>, transform_indices = @transform_2, window_bounds = array<i64: 64, 1>}, {pipeline_mode = #tpu.pipeline_mode<synchronous>, transform_indices = @transform_3, window_bounds = array<i64: 16, 64>}, {pipeline_mode = #tpu.pipeline_mode<synchronous>, transform_indices = @transform_4, window_bounds = array<i64: 16, 1>}, {pipeline_mode = #tpu.pipeline_mode<synchronous>, transform_indices = @transform_5, window_bounds = array<i64: 16, 1>}, {transform_indices = @transform_6, window_bounds = array<i64: 1, 1>}, {transform_indices = @transform_7, window_bounds = array<i64: 1, 384>}]} {
    %c0 = arith.constant 0 : index
    %c0_0 = arith.constant 0 : index
    %0 = vector.load %arg1[%c0, %c0_0] : memref<384x32xf32, #tpu.memory_space<vmem>>, vector<384x32xf32>
    %c0_1 = arith.constant 0 : index
    %c0_2 = arith.constant 0 : index
    %1 = vector.load %arg2[%c0_1, %c0_2] : memref<64x32xf32, #tpu.memory_space<vmem>>, vector<64x32xf32>
    %cst = arith.constant dense<0.000000e+00> : vector<64x384xf32>
    %2 = tpu.matmul %1, %0, %cst {dimension_numbers = #tpu.dot_dimension_numbers<[1], [1], [0], [0], [0, 0, 1, 0], [], []>} : vector<64x32xf32>, vector<384x32xf32>, vector<64x384xf32> -> vector<64x384xf32>
    %c0_3 = arith.constant 0 : index
    %c0_4 = arith.constant 0 : index
    %3 = vector.load %arg3[%c0_3, %c0_4] : memref<64x1xf32, #tpu.memory_space<vmem>>, vector<64x1xf32>
    %4 = vector.broadcast %3 : vector<64x1xf32> to vector<64x384xf32>
    %5 = arith.addf %2, %4 : vector<64x384xf32>
    %cst_5 = arith.constant 0.000000e+00 : f32
    %6 = vector.broadcast %cst_5 : f32 to vector<64x384xf32>
    %7 = arith.maximumf %5, %6 : vector<64x384xf32>
    %c0_6 = arith.constant 0 : index
    %c0_7 = arith.constant 0 : index
    %8 = vector.load %arg4[%c0_6, %c0_7] : memref<16x64xf32, #tpu.memory_space<vmem>>, vector<16x64xf32>
    %cst_8 = arith.constant dense<0.000000e+00> : vector<16x384xf32>
    %9 = tpu.matmul %8, %7, %cst_8 {dimension_numbers = #tpu.dot_dimension_numbers<[1], [0], [0], [1], [0, 0, 1, 1], [], []>} : vector<16x64xf32>, vector<64x384xf32>, vector<16x384xf32> -> vector<16x384xf32>
    %c0_9 = arith.constant 0 : index
    %c0_10 = arith.constant 0 : index
    %10 = vector.load %arg5[%c0_9, %c0_10] : memref<16x1xf32, #tpu.memory_space<vmem>>, vector<16x1xf32>
    %11 = vector.broadcast %10 : vector<16x1xf32> to vector<16x384xf32>
    %12 = arith.addf %9, %11 : vector<16x384xf32>
    %cst_11 = arith.constant 0.000000e+00 : f32
    %13 = vector.broadcast %cst_11 : f32 to vector<16x384xf32>
    %14 = arith.maximumf %12, %13 : vector<16x384xf32>
    %c0_12 = arith.constant 0 : index
    %c0_13 = arith.constant 0 : index
    %15 = vector.load %arg6[%c0_12, %c0_13] : memref<16x1xf32, #tpu.memory_space<vmem>>, vector<16x1xf32>
    %16 = vector.broadcast %15 : vector<16x1xf32> to vector<16x384xf32>
    %17 = arith.mulf %14, %16 : vector<16x384xf32>
    %cst_14 = arith.constant dense<0.000000e+00> : vector<384xf32>
    %18 = vector.multi_reduction <add>, %17, %cst_14 [0] : vector<16x384xf32> to vector<384xf32>
    %19 = vector.shape_cast %18 : vector<384xf32> to vector<1x384xf32>
    %c0_15 = arith.constant 0 : index
    %c0_16 = arith.constant 0 : index
    %20 = memref.load %arg7[%c0_15, %c0_16] : memref<1x1xf32, #tpu.memory_space<smem>>
    %21 = vector.broadcast %20 : f32 to vector<1x384xf32>
    %22 = arith.addf %19, %21 : vector<1x384xf32>
    %23 = math.tanh %22 : vector<1x384xf32>
    %c0_17 = arith.constant 0 : index
    %c0_18 = arith.constant 0 : index
    %24 = vector.load %arg8[%c0_17, %c0_18] : memref<1x384xf32, #tpu.memory_space<vmem>>, vector<1x384xf32>
    tpu.vector_store %arg8[%c0_17, %c0_18], %23 {strides = array<i32>} : memref<1x384xf32, #tpu.memory_space<vmem>>, vector<1x384xf32>,
    return
  }
  func.func @transform_0(%arg0: i32) -> (i32, i32) {
    %c0_i32 = arith.constant 0 : i32
    %c0_i32_0 = arith.constant 0 : i32
    return %arg0, %c0_i32 : i32, i32
  }
  func.func @transform_1(%arg0: i32) -> (i32, i32) {
    %c0_i32 = arith.constant 0 : i32
    %c0_i32_0 = arith.constant 0 : i32
    %c0_i32_1 = arith.constant 0 : i32
    return %c0_i32, %c0_i32_0 : i32, i32
  }
  func.func @transform_2(%arg0: i32) -> (i32, i32) {
    %c0_i32 = arith.constant 0 : i32
    %c0_i32_0 = arith.constant 0 : i32
    %c0_i32_1 = arith.constant 0 : i32
    return %c0_i32, %c0_i32_0 : i32, i32
  }
  func.func @transform_3(%arg0: i32) -> (i32, i32) {
    %c0_i32 = arith.constant 0 : i32
    %c0_i32_0 = arith.constant 0 : i32
    %c0_i32_1 = arith.constant 0 : i32
    return %c0_i32, %c0_i32_0 : i32, i32
  }
  func.func @transform_4(%arg0: i32) -> (i32, i32) {
    %c0_i32 = arith.constant 0 : i32
    %c0_i32_0 = arith.constant 0 : i32
    %c0_i32_1 = arith.constant 0 : i32
    return %c0_i32, %c0_i32_0 : i32, i32
  }
  func.func @transform_5(%arg0: i32) -> (i32, i32) {
    %c0_i32 = arith.constant 0 : i32
    %c0_i32_0 = arith.constant 0 : i32
    %c0_i32_1 = arith.constant 0 : i32
    return %c0_i32, %c0_i32_0 : i32, i32
  }
  func.func @transform_6(%arg0: i32) -> (i32, i32) {
    %c0_i32 = arith.constant 0 : i32
    %c0_i32_0 = arith.constant 0 : i32
    %c0_i32_1 = arith.constant 0 : i32
    return %c0_i32, %c0_i32_0 : i32, i32
  }
  func.func @transform_7(%arg0: i32) -> (i32, i32) {
    %c0_i32 = arith.constant 0 : i32
    %c0_i32_0 = arith.constant 0 : i32
    return %c0_i32, %arg0 : i32, i32
  }
}

</mosaic_0001>

<llo_original>
// kernel: tpu_custom_call.1
$region0: #{tpu_custom_call.1}
  #allocation0 [shape = 'u32[]', space=smem, size = 0x4, offset = 0x4, fixed_abs, tag = 'smem constant byte address 0x4 - core index']
  #allocation1 [shape = 'u32[144,128]{1,0:T(1,128)}', space=vmem, size = 0x12000, scoped, tag = 'internal scratch']
  #allocation2 [shape = 'f32[1,1]{1,0:T(1,128)S(6)}', space=smem, size = 0x200, scoped, tag = 'scoped memory for tpu_custom_call.1']
  %s0 = inlined_call_operand.vmem [shape: f32[300,32], index: 0, kind: input, shape index: {}]
  %s1 = inlined_call_operand.vmem [shape: f32[64,32], index: 1, kind: input, shape index: {}]
  %s2 = inlined_call_operand.vmem [shape: f32[64,1], index: 2, kind: input, shape index: {}]
  %s3 = inlined_call_operand.vmem [shape: f32[16,64], index: 3, kind: input, shape index: {}]
  %s4 = inlined_call_operand.vmem [shape: f32[16,1], index: 4, kind: input, shape index: {}]
  %s5 = inlined_call_operand.vmem [shape: f32[16,1], index: 5, kind: input, shape index: {}]
  %s6 = inlined_call_operand.<no memory space> [shape: f32[1,1], index: 6, kind: input, shape index: {}]
  %s7 = inlined_call_operand.hbm [shape: f32[1,300], index: 7, kind: output, shape index: {}]
  %s8 = sld [smem:[#allocation0]]
  $region38: #{tpu_custom_call.1} parent=0
    _
  %s10 = ssub.s32 1, %s8
  %s11 = scalar_select 0, %s10, %s8
  %12 = sst [smem:[#allocation2]] %s6
  $region1: #{tpu_custom_call.1} parent=0
    #allocation3 [shape = 'u8[1536]{0}', space=vmem, size = 0x800, scoped, tag = 'output window, operand 0, single buffered']
    #allocation4 [shape = 's32[1]{0}', space=sflag, size = 0x4, scoped, tag = 'scoped memory for tpu_custom_call.1']
    %13 = vsyncpa [#allocation4], 0
    // Predicated region
    $region2: #{tpu_custom_call.1} parent=1 // pred_check
      _
    $region3: #{tpu_custom_call.1} parent=1 // pred_check_branch
      %15 = sbr.rel (0) target = $region5
    $region4: #{tpu_custom_call.1} parent=1 // pred_region
      _
    $region5: #{tpu_custom_call.1} parent=1 // pred_fallthru
      _
    // Predicated region
    $region6: #{tpu_custom_call.1} parent=1 // pred_check
      _
    $region7: #{tpu_custom_call.1} parent=1 // pred_check_branch
      %17 = sbr.rel (0) target = $region9
    $region8: #{tpu_custom_call.1} parent=1 // pred_region
      _
    $region9: #{tpu_custom_call.1} parent=1 // pred_fallthru
      _
    // Predicated region
    $region10: #{tpu_custom_call.1} parent=1 // pred_check
      _
    $region11: #{tpu_custom_call.1} parent=1 // pred_check_branch
      %19 = sbr.rel (0) target = $region13
    $region12: #{tpu_custom_call.1} parent=1 // pred_region
      _
    $region13: #{tpu_custom_call.1} parent=1 // pred_fallthru
      _
    // Predicated region
    $region14: #{tpu_custom_call.1} parent=1 // pred_check
      _
    $region15: #{tpu_custom_call.1} parent=1 // pred_check_branch
      %21 = sbr.rel (0) target = $region17
    $region16: #{tpu_custom_call.1} parent=1 // pred_region
      _
    $region17: #{tpu_custom_call.1} parent=1 // pred_fallthru
      _
    // Predicated region
    $region18: #{tpu_custom_call.1} parent=1 // pred_check
      _
    $region19: #{tpu_custom_call.1} parent=1 // pred_check_branch
      %23 = sbr.rel (0) target = $region21
    $region20: #{tpu_custom_call.1} parent=1 // pred_region
      _
    $region21: #{tpu_custom_call.1} parent=1 // pred_fallthru
      _
    // Predicated region
    $region22: #{tpu_custom_call.1} parent=1 // pred_check
      _
    $region23: #{tpu_custom_call.1} parent=1 // pred_check_branch
      %25 = sbr.rel (0) target = $region25
    $region24: #{tpu_custom_call.1} parent=1 // pred_region
      _
    $region25: #{tpu_custom_call.1} parent=1 // pred_fallthru
      _
    // Predicated region
    $region26: #{tpu_custom_call.1} parent=1 // pred_check
      _
    $region27: #{tpu_custom_call.1} parent=1 // pred_check_branch
      %27 = sbr.rel (0) target = $region29
    $region28: #{tpu_custom_call.1} parent=1 // pred_region
      _
    $region29: #{tpu_custom_call.1} parent=1 // pred_fallthru
      _
    %v28 = vld [vmem:[%s0] sm:$0xff]
    %v29 = vld [vmem:[%s0 + $0x8] sm:$0xff]
    %v30 = vld [vmem:[%s0 + $0x10] sm:$0xff]
    %v31 = vld [vmem:[%s0 + $0x18] sm:$0xff]
    %v32 = vld [vmem:[%s0 + $0x20] sm:$0xff]
    %v33 = vld [vmem:[%s0 + $0x28] sm:$0xff]
    %v34 = vld [vmem:[%s0 + $0x30] sm:$0xff]
    %v35 = vld [vmem:[%s0 + $0x38] sm:$0xff]
    %v36 = vld [vmem:[%s0 + $0x40] sm:$0xff]
    %v37 = vld [vmem:[%s0 + $0x48] sm:$0xff]
    %v38 = vld [vmem:[%s0 + $0x50] sm:$0xff]
    %v39 = vld [vmem:[%s0 + $0x58] sm:$0xff]
    %v40 = vld [vmem:[%s0 + $0x60] sm:$0xff]
    %v41 = vld [vmem:[%s0 + $0x68] sm:$0xff]
    %v42 = vld [vmem:[%s0 + $0x70] sm:$0xff]
    %v43 = vld [vmem:[%s0 + $0x78] sm:$0xff]
    %v44 = vld [vmem:[%s0 + $0x80] sm:$0xff]
    %v45 = vld [vmem:[%s0 + $0x88] sm:$0xff]
    %v46 = vld [vmem:[%s0 + $0x90] sm:$0xff]
    %v47 = vld [vmem:[%s0 + $0x98] sm:$0xff]
    %v48 = vld [vmem:[%s0 + $0xa0] sm:$0xff]
    %v49 = vld [vmem:[%s0 + $0xa8] sm:$0xff]
    %v50 = vld [vmem:[%s0 + $0xb0] sm:$0xff]
    %v51 = vld [vmem:[%s0 + $0xb8] sm:$0xff]
    %v52 = vld [vmem:[%s0 + $0xc0] sm:$0xff]
    %v53 = vld [vmem:[%s0 + $0xc8] sm:$0xff]
    %v54 = vld [vmem:[%s0 + $0xd0] sm:$0xff]
    %v55 = vld [vmem:[%s0 + $0xd8] sm:$0xff]
    %v56 = vld [vmem:[%s0 + $0xe0] sm:$0xff]
    %v57 = vld [vmem:[%s0 + $0xe8] sm:$0xff]
    %v58 = vld [vmem:[%s0 + $0xf0] sm:$0xff]
    %v59 = vld [vmem:[%s0 + $0xf8] sm:$0xff]
    %v60 = vld [vmem:[%s0 + $0x100] sm:$0xff]
    %v61 = vld [vmem:[%s0 + $0x108] sm:$0xff]
    %v62 = vld [vmem:[%s0 + $0x110] sm:$0xff]
    %v63 = vld [vmem:[%s0 + $0x118] sm:$0xff]
    %v64 = vld [vmem:[%s0 + $0x120] sm:$0xff]
    %v65 = vld [vmem:[%s0 + $0x128] sm:$0xff]
    %v66 = vld [vmem:[%s0 + $0x130] sm:$0xff]
    %v67 = vld [vmem:[%s0 + $0x138] sm:$0xff]
    %v68 = vld [vmem:[%s0 + $0x140] sm:$0xff]
    %v69 = vld [vmem:[%s0 + $0x148] sm:$0xff]
    %v70 = vld [vmem:[%s0 + $0x150] sm:$0xff]
    %v71 = vld [vmem:[%s0 + $0x158] sm:$0xff]
    %v72 = vld [vmem:[%s0 + $0x160] sm:$0xff]
    %v73 = vld [vmem:[%s0 + $0x168] sm:$0xff]
    %v74 = vld [vmem:[%s0 + $0x170] sm:$0xff]
    %v75 = vld [vmem:[%s0 + $0x178] sm:$0xff]
    %v76 = vld [vmem:[%s1] sm:$0xff]
    %v77 = vld [vmem:[%s1 + $0x8] sm:$0xff]
    %v78 = vld [vmem:[%s1 + $0x10] sm:$0xff]
    %v79 = vld [vmem:[%s1 + $0x18] sm:$0xff]
    %v80 = vld [vmem:[%s1 + $0x20] sm:$0xff]
    %v81 = vld [vmem:[%s1 + $0x28] sm:$0xff]
    %v82 = vld [vmem:[%s1 + $0x30] sm:$0xff]
    %v83 = vld [vmem:[%s1 + $0x38] sm:$0xff]
    %v84 = vld [vmem:[%s2] sm:$0xff]
    %v85 = vld [vmem:[%s2 + $0x8] sm:$0xff]
    %v86 = vld [vmem:[%s2 + $0x10] sm:$0xff]
    %v87 = vld [vmem:[%s2 + $0x18] sm:$0xff]
    %v88 = vld [vmem:[%s2 + $0x20] sm:$0xff]
    %v89 = vld [vmem:[%s2 + $0x28] sm:$0xff]
    %v90 = vld [vmem:[%s2 + $0x30] sm:$0xff]
    %v91 = vld [vmem:[%s2 + $0x38] sm:$0xff]
    %93 = vset.pattern.permute.xlu0 0
    %94 = vperm.xlu0 %93, %v84
    %v95 = vpop.permute.xlu0 %94
    %98 = vset.pattern.permute.xlu0 0
    %99 = vperm.xlu0 %98, %v85
    %v100 = vpop.permute.xlu0 %99
    %103 = vset.pattern.permute.xlu0 0
    %104 = vperm.xlu0 %103, %v86
    %v105 = vpop.permute.xlu0 %104
    %108 = vset.pattern.permute.xlu0 0
    %109 = vperm.xlu0 %108, %v87
    %v110 = vpop.permute.xlu0 %109
    %113 = vset.pattern.permute.xlu0 0
    %114 = vperm.xlu0 %113, %v88
    %v115 = vpop.permute.xlu0 %114
    %118 = vset.pattern.permute.xlu0 0
    %119 = vperm.xlu0 %118, %v89
    %v120 = vpop.permute.xlu0 %119
    %123 = vset.pattern.permute.xlu0 0
    %124 = vperm.xlu0 %123, %v90
    %v125 = vpop.permute.xlu0 %124
    %128 = vset.pattern.permute.xlu0 0
    %129 = vperm.xlu0 %128, %v91
    %v130 = vpop.permute.xlu0 %129
    %vm132 = vcmask 261120
    %v134 = vsel %vm132, %v76, 0
    %v137 = vsel %vm132, %v77, 0
    %v140 = vsel %vm132, %v78, 0
    %v143 = vsel %vm132, %v79, 0
    %v146 = vsel %vm132, %v80, 0
    %v149 = vsel %vm132, %v81, 0
    %v152 = vsel %vm132, %v82, 0
    %v155 = vsel %vm132, %v83, 0
    %v158 = vsel %vm132, %v28, 0
    %v161 = vsel %vm132, %v29, 0
    %v164 = vsel %vm132, %v30, 0
    %v167 = vsel %vm132, %v31, 0
    %v170 = vsel %vm132, %v32, 0
    %v173 = vsel %vm132, %v33, 0
    %v176 = vsel %vm132, %v34, 0
    %v179 = vsel %vm132, %v35, 0
    %v182 = vsel %vm132, %v36, 0
    %v185 = vsel %vm132, %v37, 0
    %v188 = vsel %vm132, %v38, 0
    %v191 = vsel %vm132, %v39, 0
    %v194 = vsel %vm132, %v40, 0
    %v197 = vsel %vm132, %v41, 0
    %v200 = vsel %vm132, %v42, 0
    %v203 = vsel %vm132, %v43, 0
    %v206 = vsel %vm132, %v44, 0
    %v209 = vsel %vm132, %v45, 0
    %v212 = vsel %vm132, %v46, 0
    %v215 = vsel %vm132, %v47, 0
    %v218 = vsel %vm132, %v48, 0
    %v221 = vsel %vm132, %v49, 0
    %v224 = vsel %vm132, %v50, 0
    %v227 = vsel %vm132, %v51, 0
    %v230 = vsel %vm132, %v52, 0
    %v233 = vsel %vm132, %v53, 0
    %v236 = vsel %vm132, %v54, 0
    %v239 = vsel %vm132, %v55, 0
    %v242 = vsel %vm132, %v56, 0
    %v245 = vsel %vm132, %v57, 0
    %v248 = vsel %vm132, %v58, 0
    %v251 = vsel %vm132, %v59, 0
    %v254 = vsel %vm132, %v60, 0
    %v257 = vsel %vm132, %v61, 0
    %v260 = vsel %vm132, %v62, 0
    %v263 = vsel %vm132, %v63, 0
    %v266 = vsel %vm132, %v64, 0
    %v269 = vsel %vm132, %v65, 0
    %v272 = vsel %vm132, %v66, 0
    %v275 = vsel %vm132, %v67, 0
    %v278 = vsel %vm132, %v68, 0
    %v281 = vsel %vm132, %v69, 0
    %v284 = vsel %vm132, %v70, 0
    %v287 = vsel %vm132, %v71, 0
    %v290 = vsel %vm132, %v72, 0
    %v293 = vsel %vm132, %v73, 0
    %v296 = vsel %vm132, %v74, 0
    %v299 = vsel %vm132, %v75, 0
    %301 = vmatprep.subr.mxu0 0.0
    %302 = vmatpush1.xpose.msra.mxu0 %v158
    %303 = vmatprep.subr.mxu0 0.0
    %304 = vmatpush1.xpose.msra.mxu0 %v161
    %305 = vmatprep.subr.mxu0 0.0
    %306 = vmatpush1.xpose.msra.mxu0 %v164
    %307 = vmatprep.subr.mxu0 0.0
    %308 = vmatpush1.xpose.msra.mxu0 %v167
    %309 = vmatprep.subr.mxu0 0.0
    %310 = vmatpush1.xpose.msra.mxu0 %v170
    %311 = vmatprep.subr.mxu0 0.0
    %312 = vmatpush1.xpose.msra.mxu0 %v173
    %313 = vmatprep.subr.mxu0 0.0
    %314 = vmatpush1.xpose.msra.mxu0 %v176
    %315 = vmatprep.subr.mxu0 0.0
    %316 = vmatpush1.xpose.msra.mxu0 %v179
    %317 = vmatprep.subr.mxu0 0.0
    %318 = vmatpush1.xpose.msra.mxu0 %v182
    %319 = vmatprep.subr.mxu0 0.0
    %320 = vmatpush1.xpose.msra.mxu0 %v185
    %321 = vmatprep.subr.mxu0 0.0
    %322 = vmatpush1.xpose.msra.mxu0 %v188
    %323 = vmatprep.subr.mxu0 0.0
    %324 = vmatpush1.xpose.msra.mxu0 %v191
    %325 = vmatprep.subr.mxu0 0.0
    %326 = vmatpush1.xpose.msra.mxu0 %v194
    %327 = vmatprep.subr.mxu0 0.0
    %328 = vmatpush1.xpose.msra.mxu0 %v197
    %329 = vmatprep.subr.mxu0 0.0
    %330 = vmatpush1.xpose.msra.mxu0 %v200
    %331 = vmatprep.subr.mxu0 0.0
    %332 = vmatpush1.xpose.msra.mxu0 %v203
    %333 = vmatprep.subr.mxu0 0.0
    %334 = vmatpush1.xpose.msra.mxu0 %v206
    %335 = vmatprep.subr.mxu0 0.0
    %336 = vmatpush1.xpose.msra.mxu0 %v209
    %337 = vmatprep.subr.mxu0 0.0
    %338 = vmatpush1.xpose.msra.mxu0 %v212
    %339 = vmatprep.subr.mxu0 0.0
    %340 = vmatpush1.xpose.msra.mxu0 %v215
    %341 = vmatprep.subr.mxu0 0.0
    %342 = vmatpush1.xpose.msra.mxu0 %v218
    %343 = vmatprep.subr.mxu0 0.0
    %344 = vmatpush1.xpose.msra.mxu0 %v221
    %345 = vmatprep.subr.mxu0 0.0
    %346 = vmatpush1.xpose.msra.mxu0 %v224
    %347 = vmatprep.subr.mxu0 0.0
    %348 = vmatpush1.xpose.msra.mxu0 %v227
    %349 = vmatprep.subr.mxu0 0.0
    %350 = vmatpush1.xpose.msra.mxu0 %v230
    %351 = vmatprep.subr.mxu0 0.0
    %352 = vmatpush1.xpose.msra.mxu0 %v233
    %353 = vmatprep.subr.mxu0 0.0
    %354 = vmatpush1.xpose.msra.mxu0 %v236
    %355 = vmatprep.subr.mxu0 0.0
    %356 = vmatpush1.xpose.msra.mxu0 %v239
    %357 = vmatprep.subr.mxu0 0.0
    %358 = vmatpush1.xpose.msra.mxu0 %v242
    %359 = vmatprep.subr.mxu0 0.0
    %360 = vmatpush1.xpose.msra.mxu0 %v245
    %361 = vmatprep.subr.mxu0 0.0
    %362 = vmatpush1.xpose.msra.mxu0 %v248
    %363 = vmatprep.subr.mxu0 0.0
    %364 = vmatpush1.xpose.msra.mxu0 %v251
    %365 = vmatprep.mubr.f32.mxu0 0.0
    %366 = vmatmul.mubr.f32.gmra.mrb[0].mxu0 %v134
    %v367 = vpop.f32.mrb[0].mxu0
    %v368 = vadd.f32 %v95, %v367
    %v369 = vpop.f32.mrb[0].mxu0
    %v370 = vadd.f32 %v95, %v369
    %371 = vmatprep.mubr.f32.mxu0 0.0
    %372 = vmatmul.mubr.f32.gmra.mrb[0].mxu0 %v137
    %v373 = vpop.f32.mrb[0].mxu0
    %v374 = vadd.f32 %v100, %v373
    %v375 = vpop.f32.mrb[0].mxu0
    %v376 = vadd.f32 %v100, %v375
    %377 = vmatprep.mubr.f32.mxu0 0.0
    %378 = vmatmul.mubr.f32.gmra.mrb[0].mxu0 %v140
    %v379 = vpop.f32.mrb[0].mxu0
    %v380 = vadd.f32 %v105, %v379
    %v381 = vpop.f32.mrb[0].mxu0
    %v382 = vadd.f32 %v105, %v381
    %383 = vmatprep.mubr.f32.mxu0 0.0
    %384 = vmatmul.mubr.f32.gmra.mrb[0].mxu0 %v143
    %v385 = vpop.f32.mrb[0].mxu0
    %v386 = vadd.f32 %v110, %v385
    %v387 = vpop.f32.mrb[0].mxu0
    %v388 = vadd.f32 %v110, %v387
    %389 = vmatprep.mubr.f32.mxu0 0.0
    %390 = vmatmul.mubr.f32.gmra.mrb[0].mxu0 %v146
    %v391 = vpop.f32.mrb[0].mxu0
    %v392 = vadd.f32 %v115, %v391
    %v393 = vpop.f32.mrb[0].mxu0
    %v394 = vadd.f32 %v115, %v393
    %395 = vmatprep.mubr.f32.mxu0 0.0
    %396 = vmatmul.mubr.f32.gmra.mrb[0].mxu0 %v149
    %v397 = vpop.f32.mrb[0].mxu0
    %v398 = vadd.f32 %v120, %v397
    %v399 = vpop.f32.mrb[0].mxu0
    %v400 = vadd.f32 %v120, %v399
    %401 = vmatprep.mubr.f32.mxu0 0.0
    %402 = vmatmul.mubr.f32.gmra.mrb[0].mxu0 %v152
    %v403 = vpop.f32.mrb[0].mxu0
    %v404 = vadd.f32 %v125, %v403
    %v405 = vpop.f32.mrb[0].mxu0
    %v406 = vadd.f32 %v125, %v405
    %407 = vmatprep.mubr.f32.mxu0 0.0
    %408 = vmatmul.mubr.f32.gmra.mrb[0].mxu0 %v155
    %v409 = vpop.f32.mrb[0].mxu0
    %v410 = vadd.f32 %v130, %v409
    %v411 = vpop.f32.mrb[0].mxu0
    %v412 = vadd.f32 %v130, %v411
    %413 = vdwg.mxu0
    %414 = vmatprep.subr.mxu0 0.0
    %415 = vmatpush1.xpose.msra.mxu0 %v254
    %416 = vmatprep.subr.mxu0 0.0
    %417 = vmatpush1.xpose.msra.mxu0 %v257
    %418 = vmatprep.subr.mxu0 0.0
    %419 = vmatpush1.xpose.msra.mxu0 %v260
    %420 = vmatprep.subr.mxu0 0.0
    %421 = vmatpush1.xpose.msra.mxu0 %v263
    %422 = vmatprep.subr.mxu0 0.0
    %423 = vmatpush1.xpose.msra.mxu0 %v266
    %424 = vmatprep.subr.mxu0 0.0
    %425 = vmatpush1.xpose.msra.mxu0 %v269
    %426 = vmatprep.subr.mxu0 0.0
    %427 = vmatpush1.xpose.msra.mxu0 %v272
    %428 = vmatprep.subr.mxu0 0.0
    %429 = vmatpush1.xpose.msra.mxu0 %v275
    %430 = vmatprep.subr.mxu0 0.0
    %431 = vmatpush1.xpose.msra.mxu0 %v278
    %432 = vmatprep.subr.mxu0 0.0
    %433 = vmatpush1.xpose.msra.mxu0 %v281
    %434 = vmatprep.subr.mxu0 0.0
    %435 = vmatpush1.xpose.msra.mxu0 %v284
    %436 = vmatprep.subr.mxu0 0.0
    %437 = vmatpush1.xpose.msra.mxu0 %v287
    %438 = vmatprep.subr.mxu0 0.0
    %439 = vmatpush1.xpose.msra.mxu0 %v290
    %440 = vmatprep.subr.mxu0 0.0
    %441 = vmatpush1.xpose.msra.mxu0 %v293
    %442 = vmatprep.subr.mxu0 0.0
    %443 = vmatpush1.xpose.msra.mxu0 %v296
    %444 = vmatprep.subr.mxu0 0.0
    %445 = vmatpush1.xpose.msra.mxu0 %v299
    %446 = vmatprep.subr.mxu0 0.0
    %447 = vmatpush1.xpose.msra.mxu0 0.0
    %448 = vmatprep.subr.mxu0 0.0
    %449 = vmatpush1.xpose.msra.mxu0 0.0
    %450 = vmatprep.subr.mxu0 0.0
    %451 = vmatpush1.xpose.msra.mxu0 0.0
    %452 = vmatprep.subr.mxu0 0.0
    %453 = vmatpush1.xpose.msra.mxu0 0.0
    %454 = vmatprep.subr.mxu0 0.0
    %455 = vmatpush1.xpose.msra.mxu0 0.0
    %456 = vmatprep.subr.mxu0 0.0
    %457 = vmatpush1.xpose.msra.mxu0 0.0
    %458 = vmatprep.subr.mxu0 0.0
    %459 = vmatpush1.xpose.msra.mxu0 0.0
    %460 = vmatprep.subr.mxu0 0.0
    %461 = vmatpush1.xpose.msra.mxu0 0.0
    %462 = vmatprep.subr.mxu0 0.0
    %463 = vmatpush1.xpose.msra.mxu0 0.0
    %464 = vmatprep.subr.mxu0 0.0
    %465 = vmatpush1.xpose.msra.mxu0 0.0
    %466 = vmatprep.subr.mxu0 0.0
    %467 = vmatpush1.xpose.msra.mxu0 0.0
    %468 = vmatprep.subr.mxu0 0.0
    %469 = vmatpush1.xpose.msra.mxu0 0.0
    %470 = vmatprep.subr.mxu0 0.0
    %471 = vmatpush1.xpose.msra.mxu0 0.0
    %472 = vmatprep.subr.mxu0 0.0
    %473 = vmatpush1.xpose.msra.mxu0 0.0
    %474 = vmatprep.subr.mxu0 0.0
    %475 = vmatpush1.xpose.msra.mxu0 0.0
    %476 = vmatprep.subr.mxu0 0.0
    %477 = vmatpush1.xpose.msra.mxu0 0.0
    %478 = vmatprep.mubr.f32.mxu0 0.0
    %479 = vmatmul.mubr.f32.gmra.mrb[0].mxu0 %v134
    %v480 = vpop.f32.mrb[0].mxu0
    %v481 = vadd.f32 %v95, %v480
    %v482 = vpop.f32.mrb[0].mxu0
    %483 = vmatprep.mubr.f32.mxu0 0.0
    %484 = vmatmul.mubr.f32.gmra.mrb[0].mxu0 %v137
    %v485 = vpop.f32.mrb[0].mxu0
    %v486 = vadd.f32 %v100, %v485
    %v487 = vpop.f32.mrb[0].mxu0
    %488 = vmatprep.mubr.f32.mxu0 0.0
    %489 = vmatmul.mubr.f32.gmra.mrb[0].mxu0 %v140
    %v490 = vpop.f32.mrb[0].mxu0
    %v491 = vadd.f32 %v105, %v490
    %v492 = vpop.f32.mrb[0].mxu0
    %493 = vmatprep.mubr.f32.mxu0 0.0
    %494 = vmatmul.mubr.f32.gmra.mrb[0].mxu0 %v143
    %v495 = vpop.f32.mrb[0].mxu0
    %v496 = vadd.f32 %v110, %v495
    %v497 = vpop.f32.mrb[0].mxu0
    %498 = vmatprep.mubr.f32.mxu0 0.0
    %499 = vmatmul.mubr.f32.gmra.mrb[0].mxu0 %v146
    %v500 = vpop.f32.mrb[0].mxu0
    %v501 = vadd.f32 %v115, %v500
    %v502 = vpop.f32.mrb[0].mxu0
    %503 = vmatprep.mubr.f32.mxu0 0.0
    %504 = vmatmul.mubr.f32.gmra.mrb[0].mxu0 %v149
    %v505 = vpop.f32.mrb[0].mxu0
    %v506 = vadd.f32 %v120, %v505
    %v507 = vpop.f32.mrb[0].mxu0
    %508 = vmatprep.mubr.f32.mxu0 0.0
    %509 = vmatmul.mubr.f32.gmra.mrb[0].mxu0 %v152
    %v510 = vpop.f32.mrb[0].mxu0
    %v511 = vadd.f32 %v125, %v510
    %v512 = vpop.f32.mrb[0].mxu0
    %513 = vmatprep.mubr.f32.mxu0 0.0
    %514 = vmatmul.mubr.f32.gmra.mrb[0].mxu0 %v155
    %v515 = vpop.f32.mrb[0].mxu0
    %v516 = vadd.f32 %v130, %v515
    %v517 = vpop.f32.mrb[0].mxu0
    %518 = vdwg.mxu0
    %v519 = vmax.f32 %v368, 0.0
    %v520 = vmax.f32 %v370, 0.0
    %v521 = vmax.f32 %v481, 0.0
    %v522 = vmax.f32 %v374, 0.0
    %v523 = vmax.f32 %v376, 0.0
    %v524 = vmax.f32 %v486, 0.0
    %v525 = vmax.f32 %v380, 0.0
    %v526 = vmax.f32 %v382, 0.0
    %v527 = vmax.f32 %v491, 0.0
    %v528 = vmax.f32 %v386, 0.0
    %v529 = vmax.f32 %v388, 0.0
    %v530 = vmax.f32 %v496, 0.0
    %v531 = vmax.f32 %v392, 0.0
    %v532 = vmax.f32 %v394, 0.0
    %v533 = vmax.f32 %v501, 0.0
    %v534 = vmax.f32 %v398, 0.0
    %v535 = vmax.f32 %v400, 0.0
    %v536 = vmax.f32 %v506, 0.0
    %v537 = vmax.f32 %v404, 0.0
    %v538 = vmax.f32 %v406, 0.0
    %v539 = vmax.f32 %v511, 0.0
    %v540 = vmax.f32 %v410, 0.0
    %v541 = vmax.f32 %v412, 0.0
    %v542 = vmax.f32 %v516, 0.0
    %v543 = vld [vmem:[%s3] sm:$0xff]
    %v544 = vld [vmem:[%s3 + $0x8] sm:$0xff]
    %v545 = vld [vmem:[%s4] sm:$0xff]
    %v546 = vld [vmem:[%s4 + $0x8] sm:$0xff]
    %548 = vset.pattern.permute.xlu0 0
    %549 = vperm.xlu0 %548, %v545
    %v550 = vpop.permute.xlu0 %549
    %553 = vset.pattern.permute.xlu0 0
    %554 = vperm.xlu0 %553, %v546
    %v555 = vpop.permute.xlu0 %554
    %vm557 = vcmask 523264
    %v559 = vsel %vm557, %v543, 0
    %v562 = vsel %vm557, %v544, 0
    %564 = vmatprep.subr.mxu0 %v520
    %565 = vmatpush1.msra.mxu0 %v519
    %566 = vmatprep.subr.mxu0 %v523
    %567 = vmatpush1.msra.mxu0 %v522
    %568 = vmatprep.subr.mxu0 %v526
    %569 = vmatpush1.msra.mxu0 %v525
    %570 = vmatprep.subr.mxu0 %v529
    %571 = vmatpush1.msra.mxu0 %v528
    %572 = vmatprep.subr.mxu0 %v532
    %573 = vmatpush1.msra.mxu0 %v531
    %574 = vmatprep.subr.mxu0 %v535
    %575 = vmatpush1.msra.mxu0 %v534
    %576 = vmatprep.subr.mxu0 %v538
    %577 = vmatpush1.msra.mxu0 %v537
    %578 = vmatprep.subr.mxu0 %v541
    %579 = vmatpush1.msra.mxu0 %v540
    %580 = vmatprep.subr.mxu0 0.0
    %581 = vmatpush1.msra.mxu0 0.0
    %582 = vmatprep.subr.mxu0 0.0
    %583 = vmatpush1.msra.mxu0 0.0
    %584 = vmatprep.subr.mxu0 0.0
    %585 = vmatpush1.msra.mxu0 0.0
    %586 = vmatprep.subr.mxu0 0.0
    %587 = vmatpush1.msra.mxu0 0.0
    %588 = vmatprep.subr.mxu0 0.0
    %589 = vmatpush1.msra.mxu0 0.0
    %590 = vmatprep.subr.mxu0 0.0
    %591 = vmatpush1.msra.mxu0 0.0
    %592 = vmatprep.subr.mxu0 0.0
    %593 = vmatpush1.msra.mxu0 0.0
    %594 = vmatprep.subr.mxu0 0.0
    %595 = vmatpush1.msra.mxu0 0.0
    %596 = vmatprep.subr.mxu0 0.0
    %597 = vmatpush1.msra.mxu0 0.0
    %598 = vmatprep.subr.mxu0 0.0
    %599 = vmatpush1.msra.mxu0 0.0
    %600 = vmatprep.subr.mxu0 0.0
    %601 = vmatpush1.msra.mxu0 0.0
    %602 = vmatprep.subr.mxu0 0.0
    %603 = vmatpush1.msra.mxu0 0.0
    %604 = vmatprep.subr.mxu0 0.0
    %605 = vmatpush1.msra.mxu0 0.0
    %606 = vmatprep.subr.mxu0 0.0
    %607 = vmatpush1.msra.mxu0 0.0
    %608 = vmatprep.subr.mxu0 0.0
    %609 = vmatpush1.msra.mxu0 0.0
    %610 = vmatprep.subr.mxu0 0.0
    %611 = vmatpush1.msra.mxu0 0.0
    %612 = vmatprep.subr.mxu0 0.0
    %613 = vmatpush1.msra.mxu0 0.0
    %614 = vmatprep.subr.mxu0 0.0
    %615 = vmatpush1.msra.mxu0 0.0
    %616 = vmatprep.subr.mxu0 0.0
    %617 = vmatpush1.msra.mxu0 0.0
    %618 = vmatprep.subr.mxu0 0.0
    %619 = vmatpush1.msra.mxu0 0.0
    %620 = vmatprep.subr.mxu0 0.0
    %621 = vmatpush1.msra.mxu0 0.0
    %622 = vmatprep.subr.mxu0 0.0
    %623 = vmatpush1.msra.mxu0 0.0
    %624 = vmatprep.subr.mxu0 0.0
    %625 = vmatpush1.msra.mxu0 0.0
    %626 = vmatprep.subr.mxu0 0.0
    %627 = vmatpush1.msra.mxu0 0.0
    %628 = vmatprep.mubr.f32.mxu0 0.0
    %629 = vmatmul.mubr.f32.gmra.mrb[0].mxu0 %v559
    %v630 = vpop.f32.mrb[0].mxu0
    %v631 = vadd.f32 %v550, %v630
    %v632 = vpop.f32.mrb[0].mxu0
    %v633 = vadd.f32 %v550, %v632
    %634 = vmatprep.mubr.f32.mxu0 0.0
    %635 = vmatmul.mubr.f32.gmra.mrb[0].mxu0 %v562
    %v636 = vpop.f32.mrb[0].mxu0
    %v637 = vadd.f32 %v555, %v636
    %v638 = vpop.f32.mrb[0].mxu0
    %v639 = vadd.f32 %v555, %v638
    %640 = vdwg.mxu0
    %641 = vmatprep.subr.mxu0 0.0
    %642 = vmatpush1.msra.mxu0 %v521
    %643 = vmatprep.subr.mxu0 0.0
    %644 = vmatpush1.msra.mxu0 %v524
    %645 = vmatprep.subr.mxu0 0.0
    %646 = vmatpush1.msra.mxu0 %v527
    %647 = vmatprep.subr.mxu0 0.0
    %648 = vmatpush1.msra.mxu0 %v530
    %649 = vmatprep.subr.mxu0 0.0
    %650 = vmatpush1.msra.mxu0 %v533
    %651 = vmatprep.subr.mxu0 0.0
    %652 = vmatpush1.msra.mxu0 %v536
    %653 = vmatprep.subr.mxu0 0.0
    %654 = vmatpush1.msra.mxu0 %v539
    %655 = vmatprep.subr.mxu0 0.0
    %656 = vmatpush1.msra.mxu0 %v542
    %657 = vmatprep.subr.mxu0 0.0
    %658 = vmatpush1.msra.mxu0 0.0
    %659 = vmatprep.subr.mxu0 0.0
    %660 = vmatpush1.msra.mxu0 0.0
    %661 = vmatprep.subr.mxu0 0.0
    %662 = vmatpush1.msra.mxu0 0.0
    %663 = vmatprep.subr.mxu0 0.0
    %664 = vmatpush1.msra.mxu0 0.0
    %665 = vmatprep.subr.mxu0 0.0
    %666 = vmatpush1.msra.mxu0 0.0
    %667 = vmatprep.subr.mxu0 0.0
    %668 = vmatpush1.msra.mxu0 0.0
    %669 = vmatprep.subr.mxu0 0.0
    %670 = vmatpush1.msra.mxu0 0.0
    %671 = vmatprep.subr.mxu0 0.0
    %672 = vmatpush1.msra.mxu0 0.0
    %673 = vmatprep.subr.mxu0 0.0
    %674 = vmatpush1.msra.mxu0 0.0
    %675 = vmatprep.subr.mxu0 0.0
    %676 = vmatpush1.msra.mxu0 0.0
    %677 = vmatprep.subr.mxu0 0.0
    %678 = vmatpush1.msra.mxu0 0.0
    %679 = vmatprep.subr.mxu0 0.0
    %680 = vmatpush1.msra.mxu0 0.0
    %681 = vmatprep.subr.mxu0 0.0
    %682 = vmatpush1.msra.mxu0 0.0
    %683 = vmatprep.subr.mxu0 0.0
    %684 = vmatpush1.msra.mxu0 0.0
    %685 = vmatprep.subr.mxu0 0.0
    %686 = vmatpush1.msra.mxu0 0.0
    %687 = vmatprep.subr.mxu0 0.0
    %688 = vmatpush1.msra.mxu0 0.0
    %689 = vmatprep.subr.mxu0 0.0
    %690 = vmatpush1.msra.mxu0 0.0
    %691 = vmatprep.subr.mxu0 0.0
    %692 = vmatpush1.msra.mxu0 0.0
    %693 = vmatprep.subr.mxu0 0.0
    %694 = vmatpush1.msra.mxu0 0.0
    %695 = vmatprep.subr.mxu0 0.0
    %696 = vmatpush1.msra.mxu0 0.0
    %697 = vmatprep.subr.mxu0 0.0
    %698 = vmatpush1.msra.mxu0 0.0
    %699 = vmatprep.subr.mxu0 0.0
    %700 = vmatpush1.msra.mxu0 0.0
    %701 = vmatprep.subr.mxu0 0.0
    %702 = vmatpush1.msra.mxu0 0.0
    %703 = vmatprep.subr.mxu0 0.0
    %704 = vmatpush1.msra.mxu0 0.0
    %705 = vmatprep.mubr.f32.mxu0 0.0
    %706 = vmatmul.mubr.f32.gmra.mrb[0].mxu0 %v559
    %v707 = vpop.f32.mrb[0].mxu0
    %v708 = vadd.f32 %v550, %v707
    %v709 = vpop.f32.mrb[0].mxu0
    %710 = vmatprep.mubr.f32.mxu0 0.0
    %711 = vmatmul.mubr.f32.gmra.mrb[0].mxu0 %v562
    %v712 = vpop.f32.mrb[0].mxu0
    %v713 = vadd.f32 %v555, %v712
    %v714 = vpop.f32.mrb[0].mxu0
    %715 = vdwg.mxu0
    %v716 = vmax.f32 %v631, 0.0
    %v717 = vmax.f32 %v633, 0.0
    %v718 = vmax.f32 %v708, 0.0
    %v719 = vmax.f32 %v637, 0.0
    %v720 = vmax.f32 %v639, 0.0
    %v721 = vmax.f32 %v713, 0.0
    %v722 = vld [vmem:[%s5] sm:$0xff]
    %v723 = vld [vmem:[%s5 + $0x8] sm:$0xff]
    %725 = vset.pattern.permute.xlu0 0
    %726 = vperm.xlu0 %725, %v722
    %v727 = vpop.permute.xlu0 %726
    %730 = vset.pattern.permute.xlu0 0
    %731 = vperm.xlu0 %730, %v723
    %v732 = vpop.permute.xlu0 %731
    %v734 = vmul.f32 %v716, %v727
    %v735 = vmul.f32 %v717, %v727
    %v736 = vmul.f32 %v718, %v727
    %v737 = vmul.f32 %v719, %v732
    %v738 = vmul.f32 %v720, %v732
    %v739 = vmul.f32 %v721, %v732
    %v740 = vadd.f32 %v734, %v737
    %v741 = vrot.slane %v740, 4
    %v742 = vadd.f32 %v740, %v741
    %v743 = vrot.slane %v742, 2
    %v744 = vadd.f32 %v742, %v743
    %v745 = vrot.slane %v744, 1
    %v746 = vadd.f32 %v744, %v745
    %v747 = vadd.f32 %v735, %v738
    %v748 = vrot.slane %v747, 4
    %v749 = vadd.f32 %v747, %v748
    %v750 = vrot.slane %v749, 2
    %v751 = vadd.f32 %v749, %v750
    %v752 = vrot.slane %v751, 1
    %v753 = vadd.f32 %v751, %v752
    %v754 = vadd.f32 %v736, %v739
    %v755 = vrot.slane %v754, 4
    %v756 = vadd.f32 %v754, %v755
    %v757 = vrot.slane %v756, 2
    %v758 = vadd.f32 %v756, %v757
    %v759 = vrot.slane %v758, 1
    %v760 = vadd.f32 %v758, %v759
    %s761 = sld [smem:[#allocation2]]
    %v762 = vstv %s761
    %v763 = vadd.f32 %v746, %v762
    %v764 = vadd.f32 %v753, %v762
    %v765 = vadd.f32 %v760, %v762
    %v766 = vtanh.pop %v763
    %v767 = vtanh.pop %v764
    %v768 = vtanh.pop %v765
    %v772 = vcombine.low %v766, %v767
    %v774 = vunpack.c.l.s4 1966171168
    %v775 = vunpack.c.0.s8 %v774
    %v776 = vlaneseq
    %v777 = vshrl.u32 %v776, 7
    %v778 = vsub.s32 %v775, %v777
    %v779 = vrot.slane %v772, %v778
    %v781 = vunpack.c.l.s4 1966171168
    %v782 = vunpack.c.0.s8 %v781
    %v783 = vlaneseq
    %v784 = vshrl.u32 %v783, 7
    %v785 = vsub.s32 %v782, %v784
    %v786 = vrot.slane %v768, %v785
    %v787 = vcombine.low %v779, %v786
    %v789 = vunpack.c.l.s4 1966171168
    %v790 = vunpack.c.0.s8 %v789
    %v791 = vlaneseq
    %v792 = vshrl.u32 %v791, 7
    %v793 = vsub.s32 %v790, %v792
    %v794 = vrot.slane %v787, %v793
    %v796 = vlaneseq
    %vm797 = vcmp.ge.s32.totalorder %v796, 0
    %vm798 = vcmp.lt.s32.totalorder %v796, 384
    %vm799 = vmand %vm797, %vm798
    %800 = vst.msk [vmem:[#allocation3] sm:$0x7] %vm799, %v794
    // Predicated region
    $region30: #{tpu_custom_call.1} parent=1 // pred_check
      _
    $region31: #{tpu_custom_call.1} parent=1 // pred_check_branch
      %802 = sbr.rel (0) target = $region33
    $region32: #{tpu_custom_call.1} parent=1 // pred_region
      %s804 = ssub.s32 48, 48
      %805 = vsyncadd [#allocation4], %s804
      %s807 = sshll.u32 [#allocation3], 4
      %s808 = int_to_ptr.vmem [resolvable:$true] %s807
      %810 = dma.vmem_to_hbm [thread:$0]  %s808, 48, %s7, [#allocation4]
    $region33: #{tpu_custom_call.1} parent=1 // pred_fallthru
      _
    // Predicated region
    $region34: #{tpu_custom_call.1} parent=1 // pred_check
      _
    $region35: #{tpu_custom_call.1} parent=1 // pred_check_branch
      %812 = sbr.rel (0) target = $region37
    $region36: #{tpu_custom_call.1} parent=1 // pred_region
      %813 = dma.done [#allocation4], 48
    $region37: #{tpu_custom_call.1} parent=1 // pred_fallthru
      _
    %814 = vsyncpa [#allocation4], 1

</llo_original>
